<compile_context>
chip_gen: v6e
topology: v6e:2x2x1
jax: 0.10.0
libtpu: 0.0.40
codegen_flags: <defaults>
</compile_context>

<pallas_src>
import functools

import jax
import jax.numpy as jnp
from jax.experimental import pallas as pl
from jax.experimental.pallas import tpu as pltpu

EPS = 1e-5


def resnet_block_kernel(x_ref, ss_ref, w1_ref, w2_ref, wr_ref, pp_ref, member_ref,
                        mask_ref, o_ref, *, use_stacked):
    x = x_ref[0]                                   # (Cip, Lp) bf16 (MXU operand dtype)
    Lp = x.shape[1]
    cdt = x.dtype

    # packed per-channel params: b1, g1, beta1, b2, g2, beta2, br, pad   (f32)
    pp = pp_ref[...]                               # (Cop, 8)
    b1, g1, bt1 = pp[:, 0:1], pp[:, 1:2], pp[:, 2:3]
    b2, g2, bt2 = pp[:, 3:4], pp[:, 4:5], pp[:, 5:6]
    br = pp[:, 6:7]

    ss = ss_ref[0]                                 # (Cop, 2) f32, lane-dense
    scale, shift = ss[:, 0:1], ss[:, 1:2]

    member = member_ref[...]                       # (Cop, Cop) f32, pre-scaled 1/(gs*L)

    # hoisted lane masks (built once on the host, single-buffered)
    masks = mask_ref[...]                          # (8, Lp) f32
    valid = masks[0:1, :]                          # 1.0 for l < L, else 0.0
    notfirst = masks[1:2, :]                       # 0.0 at l == 0
    notlast = masks[2:3, :]                        # 0.0 at l == Lp - 1

    def conv3(hf, hb, w_ref):
        # k=3, padding=1 conv.  hf: f32 (C, Lp) (for XLU rolls), hb: same data in bf16.
        C = hb.shape[0]
        w = w_ref[...]                             # (Cop, 3*C) bf16: [prev | mid | next]
        if use_stacked:
            # single MXU matmul with K = 3*C (best fill for small C)
            h_prev = (pltpu.roll(hf, 1, axis=1) * notfirst).astype(cdt)       # h[:, l-1]
            h_next = (pltpu.roll(hf, Lp - 1, axis=1) * notlast).astype(cdt)   # h[:, l+1]
            hs = jnp.concatenate([h_prev, hb, h_next], axis=0)                # (3C, Lp) bf16
            return jnp.dot(w, hs, preferred_element_type=jnp.float32)
        # no-concat path (large C): three K=C dots on h, roll the *outputs* instead
        z_prev = jnp.dot(w[:, :C], hb, preferred_element_type=jnp.float32)
        z_mid = jnp.dot(w[:, C:2 * C], hb, preferred_element_type=jnp.float32)
        z_next = jnp.dot(w[:, 2 * C:], hb, preferred_element_type=jnp.float32)
        return (z_mid
                + pltpu.roll(z_prev, 1, axis=1) * notfirst
                + pltpu.roll(z_next, Lp - 1, axis=1) * notlast)

    def group_norm(h, gamma, beta):
        # two-pass: mean first, then variance of centered values (no E[x^2]-E[x]^2
        # cancellation); both group reductions via the pre-scaled membership matmul.
        s1 = jnp.sum(h * valid, axis=1, keepdims=True)                        # (C, 1)
        mean = jnp.dot(member, s1, preferred_element_type=jnp.float32)        # (C, 1)
        d = (h - mean) * valid
        s2 = jnp.sum(d * d, axis=1, keepdims=True)
        var = jnp.dot(member, s2, preferred_element_type=jnp.float32)
        return (h - mean) * jax.lax.rsqrt(var + EPS) * gamma + beta

    # --- block1: conv3 -> GN -> (scale, shift) -> SiLU ---
    xf = x.astype(jnp.float32)
    h = conv3(xf, x, w1_ref) + b1                  # (Cop, Lp) f32
    h = group_norm(h, g1, bt1)
    h = h * (scale + 1.0) + shift
    h = h * jax.nn.sigmoid(h)
    h = h * valid                                  # keep L padding exactly zero for conv2 halo

    # --- block2: conv3 -> GN -> SiLU ---
    h = conv3(h, h.astype(cdt), w2_ref) + b2
    h = group_norm(h, g2, bt2)
    h = h * jax.nn.sigmoid(h)

    # --- residual 1x1 conv ---
    res = jnp.dot(wr_ref[...], x, preferred_element_type=jnp.float32) + br
    o_ref[0] = (h + res).astype(o_ref.dtype)


def _pad_to(a, axis, size):
    if a.shape[axis] == size:
        return a
    pads = [(0, 0)] * a.ndim
    pads[axis] = (0, size - a.shape[axis])
    return jnp.pad(a, pads)


def resnet_block(x, time_emb, p, *, groups):
    B, Cin, L = x.shape
    Cout = p["b1"].shape[0]
    f32, bf16 = jnp.float32, jnp.bfloat16

    Lp = ((L + 127) // 128) * 128          # lane-dense length
    Cip = ((Cin + 15) // 16) * 16          # bf16 sublane-tile aligned channels
    Cop = ((Cout + 15) // 16) * 16

    # --- hoisted time-MLP (tiny, batched; done once by XLA instead of per grid step) ---
    emb = jax.nn.silu(time_emb) @ p["wmlp"].T + p["bmlp"]                 # (B, 2*Cout)
    ss = jnp.stack([emb[:, :Cout], emb[:, Cout:]], axis=-1)               # (B, Cout, 2)
    ss = _pad_to(ss, 1, Cop).astype(f32)

    # --- conv weights: 3 taps stacked along contraction dim [prev|mid|next], bf16 ---
    w1 = _pad_to(_pad_to(p["w1"], 1, Cip), 0, Cop)                        # (Cop, Cip, 3)
    w1c = jnp.transpose(w1, (0, 2, 1)).reshape(Cop, 3 * Cip).astype(bf16)
    w2 = _pad_to(_pad_to(p["w2"], 1, Cop), 0, Cop)                        # (Cop, Cop, 3)
    w2c = jnp.transpose(w2, (0, 2, 1)).reshape(Cop, 3 * Cop).astype(bf16)
    wr = _pad_to(_pad_to(p["wr"], 1, Cip), 0, Cop).astype(bf16)           # (Cop, Cip)

    # --- packed per-channel params (Cop, 8), f32 ---
    cp = lambda v: _pad_to(v.astype(f32), 0, Cop)
    pp = jnp.stack([cp(p["b1"]), cp(p["g1"]), cp(p["beta1"]),
                    cp(p["b2"]), cp(p["g2"]), cp(p["beta2"]),
                    cp(p["br"]), jnp.zeros((Cop,), f32)], axis=1)

    # --- GroupNorm membership matrix, pre-scaled by 1/(group_size * L) ---
    gs = Cout // groups
    gid = jnp.arange(Cout) // gs
    member = (gid[:, None] == gid[None, :]).astype(f32) / float(gs * L)
    member = _pad_to(_pad_to(member, 0, Cop), 1, Cop)                     # (Cop, Cop)

    # --- hoisted lane masks: valid (< L), not-first (!= 0), not-last (!= Lp-1) ---
    lane = jnp.arange(Lp)
    masks = jnp.zeros((8, Lp), f32)
    masks = masks.at[0].set((lane < L).astype(f32))
    masks = masks.at[1].set((lane != 0).astype(f32))
    masks = masks.at[2].set((lane != Lp - 1).astype(f32))

    # --- activations: bf16, zero L-padding doubles as the conv padding=1 halo at l=L ---
    # TODO(synk): keep activations in this padded bf16 layout across the whole network so
    #             this pad (and the slice below) are only paid at the model boundary.
    xp = _pad_to(_pad_to(x, 1, Cip), 2, Lp).astype(bf16)                  # (B, Cip, Lp)

    # stacked-K (one matmul) fills the MXU for small C; the no-concat path saves the
    # (3C, Lp) VMEM copy once C is large (v7x 64 MiB relief).
    use_stacked = max(Cip, Cop) < 128
    kernel = functools.partial(resnet_block_kernel, use_stacked=use_stacked)

    # per-step VMEM estimate -> explicit limit at <= 85% of this chip's physical VMEM
    Cm = max(Cip, Cop)
    est = (2 * Cip * Lp * 2                    # x block (bf16, double-buffered)
           + 2 * Cop * Lp * 4                  # out block (f32, double-buffered)
           + Cop * (4 * Cip + 3 * Cop) * 2     # weights (bf16, single-buffered)
           + Cop * (Cop + 8 + 4) * 4           # member + packed params + scale/shift
           + 8 * Lp * 4                        # lane masks
           + 3 * Cm * Lp * 2                   # stacked conv operand / shifted copies
           + 6 * Cop * Lp * 4)                 # f32 temporaries (h, centered, res, ...)
    try:
        vmem_cap = pltpu.get_tpu_info().vmem_capacity_bytes
    except Exception:
        vmem_cap = 64 << 20                    # conservative fallback (v7x per-core VMEM)
    vmem_limit = int(min(max(2 * est, 32 << 20), (vmem_cap * 85) // 100))

    def _const_spec(shape):
        # grid-invariant operand: never re-fetched -> single-buffer it
        return pl.BlockSpec(shape, lambda b: (0,) * len(shape),
                            pipeline_mode=pl.Buffered(1))

    out = pl.pallas_call(
        kernel,
        out_shape=jax.ShapeDtypeStruct((B, Cop, Lp), x.dtype),
        grid=(B,),
        in_specs=[
            pl.BlockSpec((1, Cip, Lp), lambda b: (b, 0, 0)),          # x (bf16)
            pl.BlockSpec((1, Cop, 2), lambda b: (b, 0, 0)),           # scale/shift (lane-dense)
            _const_spec((Cop, 3 * Cip)),                              # conv1 weight (stacked taps)
            _const_spec((Cop, 3 * Cop)),                              # conv2 weight (stacked taps)
            _const_spec((Cop, Cip)),                                  # residual 1x1 weight
            _const_spec((Cop, 8)),                                    # packed per-channel params
            _const_spec((Cop, Cop)),                                  # GN membership / n
            _const_spec((8, Lp)),                                     # lane masks
        ],
        out_specs=pl.BlockSpec((1, Cop, Lp), lambda b: (b, 0, 0)),
        compiler_params=pltpu.CompilerParams(
            dimension_semantics=("parallel",),
            vmem_limit_bytes=vmem_limit),
    )(xp, ss, w1c, w2c, wr, pp, member, masks)

    if (Cop, Lp) != (Cout, L):
        out = out[:, :Cout, :L]
    return out


# ----------------------------- pure-JAX reference -----------------------------
def ref_forward(x, time_emb, p, *, groups):
    hp = jax.lax.Precision.HIGHEST

    def conv3(h, w, b):
        y = jax.lax.conv_general_dilated(
            h, w, window_strides=(1,), padding=((1, 1),),
            dimension_numbers=("NCH", "OIH", "NCH"), precision=hp)
        return y + b.reshape(1, -1, 1)

    def gn(h, gamma, beta):
        B, C, L = h.shape
        hg = h.reshape(B, groups, -1)
        m = hg.mean(-1, keepdims=True)
        v = hg.var(-1, keepdims=True)
        hn = ((hg - m) / jnp.sqrt(v + EPS)).reshape(B, C, L)
        return hn * gamma.reshape(1, C, 1) + beta.reshape(1, C, 1)

    silu = jax.nn.silu
    emb = jnp.einsum("bt,ct->bc", silu(time_emb), p["wmlp"], precision=hp) + p["bmlp"]
    C = p["b1"].shape[0]
    scale, shift = emb[:, :C, None], emb[:, C:, None]

    h = conv3(x, p["w1"], p["b1"])
    h = gn(h, p["g1"], p["beta1"])
    h = h * (scale + 1.0) + shift
    h = silu(h)

    h = conv3(h, p["w2"], p["b2"])
    h = gn(h, p["g2"], p["beta2"])
    h = silu(h)

    res = jnp.einsum("oi,bil->bol", p["wr"], x, precision=hp) + p["br"].reshape(1, -1, 1)
    return h + res


if __name__ == "__main__":
    B, Cin, Cout, L, T, G = 2, 4, 8, 16, 32, 4

    key = jax.random.PRNGKey(0)
    ks = jax.random.split(key, 16)
    f32 = jnp.float32

    x = jax.random.normal(ks[0], (B, Cin, L), f32)
    time_emb = jax.random.normal(ks[1], (B, T), f32)

    params = {
        "wmlp": 0.1 * jax.random.normal(ks[2], (2 * Cout, T), f32),
        "bmlp": 0.1 * jax.random.normal(ks[3], (2 * Cout,), f32),
        "w1": 0.2 * jax.random.normal(ks[4], (Cout, Cin, 3), f32),
        "b1": 0.1 * jax.random.normal(ks[5], (Cout,), f32),
        "g1": 1.0 + 0.1 * jax.random.normal(ks[6], (Cout,), f32),
        "beta1": 0.1 * jax.random.normal(ks[7], (Cout,), f32),
        "w2": 0.2 * jax.random.normal(ks[8], (Cout, Cout, 3), f32),
        "b2": 0.1 * jax.random.normal(ks[9], (Cout,), f32),
        "g2": 1.0 + 0.1 * jax.random.normal(ks[10], (Cout,), f32),
        "beta2": 0.1 * jax.random.normal(ks[11], (Cout,), f32),
        "wr": 0.2 * jax.random.normal(ks[12], (Cout, Cin), f32),
        "br": 0.1 * jax.random.normal(ks[13], (Cout,), f32),
    }

    out = jax.block_until_ready(resnet_block(x, time_emb, params, groups=G))
    ref = jax.block_until_ready(ref_forward(x, time_emb, params, groups=G))

    assert out.shape == (B, Cout, L)
    # kernel uses explicit bf16 MXU operands with f32 accumulation (same error class as
    # default-precision f32 dots on TPU); compare against an f32 HIGHEST-precision
    # reference with a bf16-appropriate tolerance.
    assert jnp.allclose(out, ref, rtol=2e-2, atol=2e-2), \
        f"max abs diff = {float(jnp.max(jnp.abs(out - ref)))}"

    print("KERNEL_OK")
</pallas_src>

<mosaic_0001>
module attributes {stable_mosaic.version = 11 : i64} {
  func.func @resnet_block_kernel(%arg0: i32, %arg1: memref<1x16x128xbf16, #tpu.memory_space<vmem>>, %arg2: memref<1x16x2xf32, #tpu.memory_space<vmem>>, %arg3: memref<16x48xbf16, #tpu.memory_space<vmem>>, %arg4: memref<16x48xbf16, #tpu.memory_space<vmem>>, %arg5: memref<16x16xbf16, #tpu.memory_space<vmem>>, %arg6: memref<16x8xf32, #tpu.memory_space<vmem>>, %arg7: memref<16x16xf32, #tpu.memory_space<vmem>>, %arg8: memref<8x128xf32, #tpu.memory_space<vmem>>, %arg9: memref<1x16x128xf32, #tpu.memory_space<vmem>>) attributes {dimension_semantics = [#tpu.dimension_semantics<parallel>], iteration_bounds = array<i64: 2>, scalar_prefetch = 0 : i64, scratch_operands = 0 : i64, tpu.core_type = #tpu.core_type<tc>, window_params = [{transform_indices = @transform_0, window_bounds = array<i64: 1, 16, 128>}, {transform_indices = @transform_1, window_bounds = array<i64: 1, 16, 2>}, {pipeline_mode = #tpu.pipeline_mode<synchronous>, transform_indices = @transform_2, window_bounds = array<i64: 16, 48>}, {pipeline_mode = #tpu.pipeline_mode<synchronous>, transform_indices = @transform_3, window_bounds = array<i64: 16, 48>}, {pipeline_mode = #tpu.pipeline_mode<synchronous>, transform_indices = @transform_4, window_bounds = array<i64: 16, 16>}, {pipeline_mode = #tpu.pipeline_mode<synchronous>, transform_indices = @transform_5, window_bounds = array<i64: 16, 8>}, {pipeline_mode = #tpu.pipeline_mode<synchronous>, transform_indices = @transform_6, window_bounds = array<i64: 16, 16>}, {pipeline_mode = #tpu.pipeline_mode<synchronous>, transform_indices = @transform_7, window_bounds = array<i64: 8, 128>}, {transform_indices = @transform_8, window_bounds = array<i64: 1, 16, 128>}]} {
    %c0 = arith.constant 0 : index
    %c0_0 = arith.constant 0 : index
    %c0_1 = arith.constant 0 : index
    %0 = vector.load %arg1[%c0, %c0_0, %c0_1] : memref<1x16x128xbf16, #tpu.memory_space<vmem>>, vector<1x16x128xbf16>
    %1 = vector.shape_cast %0 : vector<1x16x128xbf16> to vector<16x128xbf16>
    %c0_2 = arith.constant 0 : index
    %c0_3 = arith.constant 0 : index
    %2 = vector.load %arg6[%c0_2, %c0_3] : memref<16x8xf32, #tpu.memory_space<vmem>>, vector<16x8xf32>
    %3 = vector.extract_strided_slice %2 {offsets = [0, 0], sizes = [16, 1], strides = [1, 1]} : vector<16x8xf32> to vector<16x1xf32>
    %4 = vector.extract_strided_slice %2 {offsets = [0, 1], sizes = [16, 1], strides = [1, 1]} : vector<16x8xf32> to vector<16x1xf32>
    %5 = vector.extract_strided_slice %2 {offsets = [0, 2], sizes = [16, 1], strides = [1, 1]} : vector<16x8xf32> to vector<16x1xf32>
    %6 = vector.extract_strided_slice %2 {offsets = [0, 3], sizes = [16, 1], strides = [1, 1]} : vector<16x8xf32> to vector<16x1xf32>
    %7 = vector.extract_strided_slice %2 {offsets = [0, 4], sizes = [16, 1], strides = [1, 1]} : vector<16x8xf32> to vector<16x1xf32>
    %8 = vector.extract_strided_slice %2 {offsets = [0, 5], sizes = [16, 1], strides = [1, 1]} : vector<16x8xf32> to vector<16x1xf32>
    %9 = vector.extract_strided_slice %2 {offsets = [0, 6], sizes = [16, 1], strides = [1, 1]} : vector<16x8xf32> to vector<16x1xf32>
    %c0_4 = arith.constant 0 : index
    %c0_5 = arith.constant 0 : index
    %c0_6 = arith.constant 0 : index
    %10 = vector.load %arg2[%c0_4, %c0_5, %c0_6] : memref<1x16x2xf32, #tpu.memory_space<vmem>>, vector<1x16x2xf32>
    %11 = vector.shape_cast %10 : vector<1x16x2xf32> to vector<16x2xf32>
    %12 = vector.extract_strided_slice %11 {offsets = [0, 0], sizes = [16, 1], strides = [1, 1]} : vector<16x2xf32> to vector<16x1xf32>
    %13 = vector.extract_strided_slice %11 {offsets = [0, 1], sizes = [16, 1], strides = [1, 1]} : vector<16x2xf32> to vector<16x1xf32>
    %c0_7 = arith.constant 0 : index
    %c0_8 = arith.constant 0 : index
    %14 = vector.load %arg7[%c0_7, %c0_8] : memref<16x16xf32, #tpu.memory_space<vmem>>, vector<16x16xf32>
    %c0_9 = arith.constant 0 : index
    %c0_10 = arith.constant 0 : index
    %15 = vector.load %arg8[%c0_9, %c0_10] : memref<8x128xf32, #tpu.memory_space<vmem>>, vector<8x128xf32>
    %16 = vector.extract_strided_slice %15 {offsets = [0, 0], sizes = [1, 128], strides = [1, 1]} : vector<8x128xf32> to vector<1x128xf32>
    %17 = vector.extract_strided_slice %15 {offsets = [1, 0], sizes = [1, 128], strides = [1, 1]} : vector<8x128xf32> to vector<1x128xf32>
    %18 = vector.extract_strided_slice %15 {offsets = [2, 0], sizes = [1, 128], strides = [1, 1]} : vector<8x128xf32> to vector<1x128xf32>
    %19 = arith.extf %1 : vector<16x128xbf16> to vector<16x128xf32>
    %c0_11 = arith.constant 0 : index
    %c0_12 = arith.constant 0 : index
    %20 = vector.load %arg3[%c0_11, %c0_12] : memref<16x48xbf16, #tpu.memory_space<vmem>>, vector<16x48xbf16>
    %c1_i32 = arith.constant 1 : i32
    %21 = tpu.dynamic_rotate %19 by %c1_i32 dim 1 : vector<16x128xf32>, i32 -> vector<16x128xf32>
    %22 = vector.broadcast %17 : vector<1x128xf32> to vector<16x128xf32>
    %23 = arith.mulf %21, %22 : vector<16x128xf32>
    %24 = arith.truncf %23 : vector<16x128xf32> to vector<16x128xbf16>
    %c127_i32 = arith.constant 127 : i32
    %25 = tpu.dynamic_rotate %19 by %c127_i32 dim 1 : vector<16x128xf32>, i32 -> vector<16x128xf32>
    %26 = vector.broadcast %18 : vector<1x128xf32> to vector<16x128xf32>
    %27 = arith.mulf %25, %26 : vector<16x128xf32>
    %28 = arith.truncf %27 : vector<16x128xf32> to vector<16x128xbf16>
    %29 = tpu.concatenate %24, %1, %28 in 0 : vector<16x128xbf16>, vector<16x128xbf16>, vector<16x128xbf16> -> vector<48x128xbf16>
    %cst = arith.constant dense<0.000000e+00> : vector<16x128xf32>
    %30 = tpu.matmul %20, %29, %cst {dimension_numbers = #tpu.dot_dimension_numbers<[1], [0], [0], [1], [0, 0, 1, 1], [], []>} : vector<16x48xbf16>, vector<48x128xbf16>, vector<16x128xf32> -> vector<16x128xf32>
    %31 = vector.broadcast %3 : vector<16x1xf32> to vector<16x128xf32>
    %32 = arith.addf %30, %31 : vector<16x128xf32>
    %33 = vector.broadcast %16 : vector<1x128xf32> to vector<16x128xf32>
    %34 = arith.mulf %32, %33 : vector<16x128xf32>
    %cst_13 = arith.constant dense<0.000000e+00> : vector<16xf32>
    %35 = vector.multi_reduction <add>, %34, %cst_13 [1] : vector<16x128xf32> to vector<16xf32>
    %36 = vector.shape_cast %35 : vector<16xf32> to vector<16x1xf32>
    %cst_14 = arith.constant dense<0.000000e+00> : vector<16x1xf32>
    %37 = tpu.matmul %14, %36, %cst_14 {dimension_numbers = #tpu.dot_dimension_numbers<[1], [0], [0], [1], [0, 0, 1, 1], [], []>} : vector<16x16xf32>, vector<16x1xf32>, vector<16x1xf32> -> vector<16x1xf32>
    %38 = vector.broadcast %37 : vector<16x1xf32> to vector<16x128xf32>
    %39 = arith.subf %32, %38 : vector<16x128xf32>
    %40 = vector.broadcast %16 : vector<1x128xf32> to vector<16x128xf32>
    %41 = arith.mulf %39, %40 : vector<16x128xf32>
    %42 = arith.mulf %41, %41 : vector<16x128xf32>
    %cst_15 = arith.constant dense<0.000000e+00> : vector<16xf32>
    %43 = vector.multi_reduction <add>, %42, %cst_15 [1] : vector<16x128xf32> to vector<16xf32>
    %44 = vector.shape_cast %43 : vector<16xf32> to vector<16x1xf32>
    %cst_16 = arith.constant dense<0.000000e+00> : vector<16x1xf32>
    %45 = tpu.matmul %14, %44, %cst_16 {dimension_numbers = #tpu.dot_dimension_numbers<[1], [0], [0], [1], [0, 0, 1, 1], [], []>} : vector<16x16xf32>, vector<16x1xf32>, vector<16x1xf32> -> vector<16x1xf32>
    %46 = vector.broadcast %37 : vector<16x1xf32> to vector<16x128xf32>
    %47 = arith.subf %32, %46 : vector<16x128xf32>
    %cst_17 = arith.constant 9.99999974E-6 : f32
    %48 = vector.broadcast %cst_17 : f32 to vector<16x1xf32>
    %49 = arith.addf %45, %48 : vector<16x1xf32>
    %50 = math.rsqrt %49 : vector<16x1xf32>
    %51 = vector.broadcast %50 : vector<16x1xf32> to vector<16x128xf32>
    %52 = arith.mulf %47, %51 : vector<16x128xf32>
    %53 = vector.broadcast %4 : vector<16x1xf32> to vector<16x128xf32>
    %54 = arith.mulf %52, %53 : vector<16x128xf32>
    %55 = vector.broadcast %5 : vector<16x1xf32> to vector<16x128xf32>
    %56 = arith.addf %54, %55 : vector<16x128xf32>
    %cst_18 = arith.constant 1.000000e+00 : f32
    %57 = vector.broadcast %cst_18 : f32 to vector<16x1xf32>
    %58 = arith.addf %12, %57 : vector<16x1xf32>
    %59 = vector.broadcast %58 : vector<16x1xf32> to vector<16x128xf32>
    %60 = arith.mulf %56, %59 : vector<16x128xf32>
    %61 = vector.broadcast %13 : vector<16x1xf32> to vector<16x128xf32>
    %62 = arith.addf %60, %61 : vector<16x128xf32>
    %63 = arith.negf %62 : vector<16x128xf32>
    %64 = math.exp %63 : vector<16x128xf32>
    %cst_19 = arith.constant 1.000000e+00 : f32
    %65 = vector.broadcast %cst_19 : f32 to vector<16x128xf32>
    %66 = arith.addf %65, %64 : vector<16x128xf32>
    %67 = arith.divf %65, %66 : vector<16x128xf32>
    %68 = arith.mulf %62, %67 : vector<16x128xf32>
    %69 = vector.broadcast %16 : vector<1x128xf32> to vector<16x128xf32>
    %70 = arith.mulf %68, %69 : vector<16x128xf32>
    %71 = arith.truncf %70 : vector<16x128xf32> to vector<16x128xbf16>
    %c0_20 = arith.constant 0 : index
    %c0_21 = arith.constant 0 : index
    %72 = vector.load %arg4[%c0_20, %c0_21] : memref<16x48xbf16, #tpu.memory_space<vmem>>, vector<16x48xbf16>
    %c1_i32_22 = arith.constant 1 : i32
    %73 = tpu.dynamic_rotate %70 by %c1_i32_22 dim 1 : vector<16x128xf32>, i32 -> vector<16x128xf32>
    %74 = vector.broadcast %17 : vector<1x128xf32> to vector<16x128xf32>
    %75 = arith.mulf %73, %74 : vector<16x128xf32>
    %76 = arith.truncf %75 : vector<16x128xf32> to vector<16x128xbf16>
    %c127_i32_23 = arith.constant 127 : i32
    %77 = tpu.dynamic_rotate %70 by %c127_i32_23 dim 1 : vector<16x128xf32>, i32 -> vector<16x128xf32>
    %78 = vector.broadcast %18 : vector<1x128xf32> to vector<16x128xf32>
    %79 = arith.mulf %77, %78 : vector<16x128xf32>
    %80 = arith.truncf %79 : vector<16x128xf32> to vector<16x128xbf16>
    %81 = tpu.concatenate %76, %71, %80 in 0 : vector<16x128xbf16>, vector<16x128xbf16>, vector<16x128xbf16> -> vector<48x128xbf16>
    %cst_24 = arith.constant dense<0.000000e+00> : vector<16x128xf32>
    %82 = tpu.matmul %72, %81, %cst_24 {dimension_numbers = #tpu.dot_dimension_numbers<[1], [0], [0], [1], [0, 0, 1, 1], [], []>} : vector<16x48xbf16>, vector<48x128xbf16>, vector<16x128xf32> -> vector<16x128xf32>
    %83 = vector.broadcast %6 : vector<16x1xf32> to vector<16x128xf32>
    %84 = arith.addf %82, %83 : vector<16x128xf32>
    %85 = vector.broadcast %16 : vector<1x128xf32> to vector<16x128xf32>
    %86 = arith.mulf %84, %85 : vector<16x128xf32>
    %cst_25 = arith.constant dense<0.000000e+00> : vector<16xf32>
    %87 = vector.multi_reduction <add>, %86, %cst_25 [1] : vector<16x128xf32> to vector<16xf32>
    %88 = vector.shape_cast %87 : vector<16xf32> to vector<16x1xf32>
    %cst_26 = arith.constant dense<0.000000e+00> : vector<16x1xf32>
    %89 = tpu.matmul %14, %88, %cst_26 {dimension_numbers = #tpu.dot_dimension_numbers<[1], [0], [0], [1], [0, 0, 1, 1], [], []>} : vector<16x16xf32>, vector<16x1xf32>, vector<16x1xf32> -> vector<16x1xf32>
    %90 = vector.broadcast %89 : vector<16x1xf32> to vector<16x128xf32>
    %91 = arith.subf %84, %90 : vector<16x128xf32>
    %92 = vector.broadcast %16 : vector<1x128xf32> to vector<16x128xf32>
    %93 = arith.mulf %91, %92 : vector<16x128xf32>
    %94 = arith.mulf %93, %93 : vector<16x128xf32>
    %cst_27 = arith.constant dense<0.000000e+00> : vector<16xf32>
    %95 = vector.multi_reduction <add>, %94, %cst_27 [1] : vector<16x128xf32> to vector<16xf32>
    %96 = vector.shape_cast %95 : vector<16xf32> to vector<16x1xf32>
    %cst_28 = arith.constant dense<0.000000e+00> : vector<16x1xf32>
    %97 = tpu.matmul %14, %96, %cst_28 {dimension_numbers = #tpu.dot_dimension_numbers<[1], [0], [0], [1], [0, 0, 1, 1], [], []>} : vector<16x16xf32>, vector<16x1xf32>, vector<16x1xf32> -> vector<16x1xf32>
    %98 = vector.broadcast %89 : vector<16x1xf32> to vector<16x128xf32>
    %99 = arith.subf %84, %98 : vector<16x128xf32>
    %cst_29 = arith.constant 9.99999974E-6 : f32
    %100 = vector.broadcast %cst_29 : f32 to vector<16x1xf32>
    %101 = arith.addf %97, %100 : vector<16x1xf32>
    %102 = math.rsqrt %101 : vector<16x1xf32>
    %103 = vector.broadcast %102 : vector<16x1xf32> to vector<16x128xf32>
    %104 = arith.mulf %99, %103 : vector<16x128xf32>
    %105 = vector.broadcast %7 : vector<16x1xf32> to vector<16x128xf32>
    %106 = arith.mulf %104, %105 : vector<16x128xf32>
    %107 = vector.broadcast %8 : vector<16x1xf32> to vector<16x128xf32>
    %108 = arith.addf %106, %107 : vector<16x128xf32>
    %109 = arith.negf %108 : vector<16x128xf32>
    %110 = math.exp %109 : vector<16x128xf32>
    %cst_30 = arith.constant 1.000000e+00 : f32
    %111 = vector.broadcast %cst_30 : f32 to vector<16x128xf32>
    %112 = arith.addf %111, %110 : vector<16x128xf32>
    %113 = arith.divf %111, %112 : vector<16x128xf32>
    %114 = arith.mulf %108, %113 : vector<16x128xf32>
    %c0_31 = arith.constant 0 : index
    %c0_32 = arith.constant 0 : index
    %115 = vector.load %arg5[%c0_31, %c0_32] : memref<16x16xbf16, #tpu.memory_space<vmem>>, vector<16x16xbf16>
    %cst_33 = arith.constant dense<0.000000e+00> : vector<16x128xf32>
    %116 = tpu.matmul %115, %1, %cst_33 {dimension_numbers = #tpu.dot_dimension_numbers<[1], [0], [0], [1], [0, 0, 1, 1], [], []>} : vector<16x16xbf16>, vector<16x128xbf16>, vector<16x128xf32> -> vector<16x128xf32>
    %117 = vector.broadcast %9 : vector<16x1xf32> to vector<16x128xf32>
    %118 = arith.addf %116, %117 : vector<16x128xf32>
    %119 = arith.addf %114, %118 : vector<16x128xf32>
    %c0_34 = arith.constant 0 : index
    %c0_35 = arith.constant 0 : index
    %c0_36 = arith.constant 0 : index
    %120 = vector.load %arg9[%c0_34, %c0_35, %c0_36] : memref<1x16x128xf32, #tpu.memory_space<vmem>>, vector<1x16x128xf32>
    %121 = vector.shape_cast %120 : vector<1x16x128xf32> to vector<16x128xf32>
    %122 = vector.shape_cast %119 : vector<16x128xf32> to vector<1x16x128xf32>
    tpu.vector_store %arg9[%c0_34, %c0_35, %c0_36], %122 {strides = array<i32>} : memref<1x16x128xf32, #tpu.memory_space<vmem>>, vector<1x16x128xf32>,
    return
  }
  func.func @transform_0(%arg0: i32) -> (i32, i32, i32) {
    %c0_i32 = arith.constant 0 : i32
    %c0_i32_0 = arith.constant 0 : i32
    %c0_i32_1 = arith.constant 0 : i32
    return %arg0, %c0_i32, %c0_i32_0 : i32, i32, i32
  }
  func.func @transform_1(%arg0: i32) -> (i32, i32, i32) {
    %c0_i32 = arith.constant 0 : i32
    %c0_i32_0 = arith.constant 0 : i32
    %c0_i32_1 = arith.constant 0 : i32
    return %arg0, %c0_i32, %c0_i32_0 : i32, i32, i32
  }
  func.func @transform_2(%arg0: i32) -> (i32, i32) {
    %c0_i32 = arith.constant 0 : i32
    %c0_i32_0 = arith.constant 0 : i32
    %c0_i32_1 = arith.constant 0 : i32
    return %c0_i32, %c0_i32_0 : i32, i32
  }
  func.func @transform_3(%arg0: i32) -> (i32, i32) {
    %c0_i32 = arith.constant 0 : i32
    %c0_i32_0 = arith.constant 0 : i32
    %c0_i32_1 = arith.constant 0 : i32
    return %c0_i32, %c0_i32_0 : i32, i32
  }
  func.func @transform_4(%arg0: i32) -> (i32, i32) {
    %c0_i32 = arith.constant 0 : i32
    %c0_i32_0 = arith.constant 0 : i32
    %c0_i32_1 = arith.constant 0 : i32
    return %c0_i32, %c0_i32_0 : i32, i32
  }
  func.func @transform_5(%arg0: i32) -> (i32, i32) {
    %c0_i32 = arith.constant 0 : i32
    %c0_i32_0 = arith.constant 0 : i32
    %c0_i32_1 = arith.constant 0 : i32
    return %c0_i32, %c0_i32_0 : i32, i32
  }
  func.func @transform_6(%arg0: i32) -> (i32, i32) {
    %c0_i32 = arith.constant 0 : i32
    %c0_i32_0 = arith.constant 0 : i32
    %c0_i32_1 = arith.constant 0 : i32
    return %c0_i32, %c0_i32_0 : i32, i32
  }
  func.func @transform_7(%arg0: i32) -> (i32, i32) {
    %c0_i32 = arith.constant 0 : i32
    %c0_i32_0 = arith.constant 0 : i32
    %c0_i32_1 = arith.constant 0 : i32
    return %c0_i32, %c0_i32_0 : i32, i32
  }
  func.func @transform_8(%arg0: i32) -> (i32, i32, i32) {
    %c0_i32 = arith.constant 0 : i32
    %c0_i32_0 = arith.constant 0 : i32
    %c0_i32_1 = arith.constant 0 : i32
    return %arg0, %c0_i32, %c0_i32_0 : i32, i32, i32
  }
}

</mosaic_0001>

<llo_original>
// kernel: tpu_custom_call.1
$region0: #{tpu_custom_call.1}
  #allocation0 [shape = 'u32[]', space=smem, size = 0x4, offset = 0x4, fixed_abs, tag = 'smem constant byte address 0x4 - core index']
  #allocation1 [shape = 'u32[144,128]{1,0:T(1,128)}', space=vmem, size = 0x12000, scoped, tag = 'internal scratch']
  %s0 = inlined_call_operand.vmem [shape: bf16[2,16,128], index: 0, kind: input, shape index: {}]
  %s1 = inlined_call_operand.vmem [shape: f32[2,16,2], index: 1, kind: input, shape index: {}]
  %s2 = inlined_call_operand.vmem [shape: bf16[16,48], index: 2, kind: input, shape index: {}]
  %s3 = inlined_call_operand.vmem [shape: bf16[16,48], index: 3, kind: input, shape index: {}]
  %s4 = inlined_call_operand.vmem [shape: bf16[16,16], index: 4, kind: input, shape index: {}]
  %s5 = inlined_call_operand.vmem [shape: f32[16,8], index: 5, kind: input, shape index: {}]
  %s6 = inlined_call_operand.vmem [shape: f32[16,16], index: 6, kind: input, shape index: {}]
  %s7 = inlined_call_operand.hbm [shape: f32[8,128], index: 7, kind: input, shape index: {}]
  %s8 = inlined_call_operand.hbm [shape: f32[2,16,128], index: 8, kind: output, shape index: {}]
  %s9 = sld [smem:[#allocation0]]
  $region69: #{tpu_custom_call.1} parent=0
    _
  %s11 = ssub.s32 1, %s9
  %s12 = scalar_select 0, %s11, %s9
  $region1: #{tpu_custom_call.1} parent=0
    #allocation2 [shape = 'u8[4096]{0}', space=vmem, size = 0x1000, scoped, tag = 'input window, operand 7, single buffered']
    #allocation3 [shape = 's32[2]{0}', space=sflag, size = 0x8, scoped, tag = 'scoped memory for tpu_custom_call.1']
    #allocation4 [shape = 's32[2]{0}', space=sflag, size = 0x8, scoped, tag = 'scoped memory for tpu_custom_call.1']
    #allocation5 [shape = 'u8[16384]{0}', space=vmem, size = 0x4000, scoped, tag = 'output window, operand 0']
    %13 = vsyncpa [#allocation3], 0
    %14 = vsyncpa [#allocation4], 0
    %s15 = scalar_lea.sflag [#allocation4], 1
    %16 = vsyncpa %s15, 0
    loop: start=0, step=1, limit=4
    $region2: #{tpu_custom_call.1} parent=1 // loop_pre_header
      _
    $region3: #{tpu_custom_call.1} parent=1 // loop_header
      %s18 = sphi 0, %s22
      %p19 = scmp.ge.s32.totalorder %s18, 4
      %s28 = sphi 0, %s30
      %s31 = sphi 0, %s28
      %s32 = sphi 0, %s31
      %s48 = sphi 0, %s32
      %s54 = sphi 0, %s56
      %s57 = sphi 0, %s54
      %s58 = sphi 0, %s57
      %s74 = sphi 0, %s58
      %s78 = sphi 0, %s78
      %s80 = sphi 0, %s78
      %s81 = sphi 0, %s80
      %s95 = sphi 0, %s81
      %s99 = sphi 0, %s99
      %s101 = sphi 0, %s99
      %s102 = sphi 0, %s101
      %s116 = sphi 0, %s102
      %s120 = sphi 0, %s120
      %s122 = sphi 0, %s120
      %s123 = sphi 0, %s122
      %s137 = sphi 0, %s123
      %s141 = sphi 0, %s141
      %s143 = sphi 0, %s141
      %s144 = sphi 0, %s143
      %s158 = sphi 0, %s144
      %s162 = sphi 0, %s162
      %s164 = sphi 0, %s162
      %s165 = sphi 0, %s164
      %s179 = sphi 0, %s165
      %s183 = sphi 0, %s183
      %s185 = sphi 0, %s183
      %s186 = sphi 0, %s185
      %s200 = sphi 0, %s186
      %s206 = sphi 0, %s208
      %s209 = sphi 0, %s206
      %s210 = sphi 0, %s209
      %s226 = sphi 0, %s210
    $region4: #{tpu_custom_call.1} parent=1 // loop_header_branch
      %21 = sbr.rel (%p19) target = $region8
    $region5: #{tpu_custom_call.1} parent=1 // loop_body
      %s23 = ssub.s32 %s18, 1
      %s24 = ssub.s32 %s18, 2
      %s25 = sadd.s32 %s18, 1
      %s26 = ssub.s32 %s18, %s25
      %p27 = scmp.eq.s32.totalorder %s26, 0
      %s29 = sadd.s32 %s28, 1
      %s30 = scalar_select %p27, %s28, %s29
      %p33 = pneg %p27
      %p34 = scmp.eq.s32.totalorder %s18, 1
      %p35 = por %p33, %p34
      %p36 = scmp.ne.s32.totalorder %s28, %s31
      %p37 = scmp.eq.s32.totalorder %s18, 0
      %p38 = por %p36, %p37
      %p39 = scmp.ne.s32.totalorder %s28, %s31
      %p40 = scmp.eq.s32.totalorder %s23, 1
      %p41 = por %p39, %p40
      %p42 = scmp.ne.s32.totalorder %s31, %s32
      %p43 = scmp.eq.s32.totalorder %s23, 0
      %p44 = por %p42, %p43
      %p45 = scmp.ne.s32.totalorder %s31, %s32
      %p46 = scmp.eq.s32.totalorder %s24, 1
      %p47 = por %p45, %p46
      %p49 = scmp.ne.s32.totalorder %s32, %s48
      %p50 = scmp.eq.s32.totalorder %s24, 0
      %p51 = por %p49, %p50
      %s52 = ssub.s32 %s18, %s25
      %p53 = scmp.eq.s32.totalorder %s52, 0
      %s55 = sadd.s32 %s54, 1
      %s56 = scalar_select %p53, %s54, %s55
      %p59 = pneg %p53
      %p60 = scmp.eq.s32.totalorder %s18, 1
      %p61 = por %p59, %p60
      %p62 = scmp.ne.s32.totalorder %s54, %s57
      %p63 = scmp.eq.s32.totalorder %s18, 0
      %p64 = por %p62, %p63
      %p65 = scmp.ne.s32.totalorder %s54, %s57
      %p66 = scmp.eq.s32.totalorder %s23, 1
      %p67 = por %p65, %p66
      %p68 = scmp.ne.s32.totalorder %s57, %s58
      %p69 = scmp.eq.s32.totalorder %s23, 0
      %p70 = por %p68, %p69
      %p71 = scmp.ne.s32.totalorder %s57, %s58
      %p72 = scmp.eq.s32.totalorder %s24, 1
      %p73 = por %p71, %p72
      %p75 = scmp.ne.s32.totalorder %s58, %s74
      %p76 = scmp.eq.s32.totalorder %s24, 0
      %p77 = por %p75, %p76
      %s79 = sadd.s32 %s78, 1
      %p82 = scmp.eq.s32.totalorder %s18, 1
      %p83 = scmp.ne.s32.totalorder %s78, %s80
      %p84 = scmp.eq.s32.totalorder %s18, 0
      %p85 = por %p83, %p84
      %p86 = scmp.ne.s32.totalorder %s78, %s80
      %p87 = scmp.eq.s32.totalorder %s23, 1
      %p88 = por %p86, %p87
      %p89 = scmp.ne.s32.totalorder %s80, %s81
      %p90 = scmp.eq.s32.totalorder %s23, 0
      %p91 = por %p89, %p90
      %p92 = scmp.ne.s32.totalorder %s80, %s81
      %p93 = scmp.eq.s32.totalorder %s24, 1
      %p94 = por %p92, %p93
      %p96 = scmp.ne.s32.totalorder %s81, %s95
      %p97 = scmp.eq.s32.totalorder %s24, 0
      %p98 = por %p96, %p97
      %s100 = sadd.s32 %s99, 1
      %p103 = scmp.eq.s32.totalorder %s18, 1
      %p104 = scmp.ne.s32.totalorder %s99, %s101
      %p105 = scmp.eq.s32.totalorder %s18, 0
      %p106 = por %p104, %p105
      %p107 = scmp.ne.s32.totalorder %s99, %s101
      %p108 = scmp.eq.s32.totalorder %s23, 1
      %p109 = por %p107, %p108
      %p110 = scmp.ne.s32.totalorder %s101, %s102
      %p111 = scmp.eq.s32.totalorder %s23, 0
      %p112 = por %p110, %p111
      %p113 = scmp.ne.s32.totalorder %s101, %s102
      %p114 = scmp.eq.s32.totalorder %s24, 1
      %p115 = por %p113, %p114
      %p117 = scmp.ne.s32.totalorder %s102, %s116
      %p118 = scmp.eq.s32.totalorder %s24, 0
      %p119 = por %p117, %p118
      %s121 = sadd.s32 %s120, 1
      %p124 = scmp.eq.s32.totalorder %s18, 1
      %p125 = scmp.ne.s32.totalorder %s120, %s122
      %p126 = scmp.eq.s32.totalorder %s18, 0
      %p127 = por %p125, %p126
      %p128 = scmp.ne.s32.totalorder %s120, %s122
      %p129 = scmp.eq.s32.totalorder %s23, 1
      %p130 = por %p128, %p129
      %p131 = scmp.ne.s32.totalorder %s122, %s123
      %p132 = scmp.eq.s32.totalorder %s23, 0
      %p133 = por %p131, %p132
      %p134 = scmp.ne.s32.totalorder %s122, %s123
      %p135 = scmp.eq.s32.totalorder %s24, 1
      %p136 = por %p134, %p135
      %p138 = scmp.ne.s32.totalorder %s123, %s137
      %p139 = scmp.eq.s32.totalorder %s24, 0
      %p140 = por %p138, %p139
      %s142 = sadd.s32 %s141, 1
      %p145 = scmp.eq.s32.totalorder %s18, 1
      %p146 = scmp.ne.s32.totalorder %s141, %s143
      %p147 = scmp.eq.s32.totalorder %s18, 0
      %p148 = por %p146, %p147
      %p149 = scmp.ne.s32.totalorder %s141, %s143
      %p150 = scmp.eq.s32.totalorder %s23, 1
      %p151 = por %p149, %p150
      %p152 = scmp.ne.s32.totalorder %s143, %s144
      %p153 = scmp.eq.s32.totalorder %s23, 0
      %p154 = por %p152, %p153
      %p155 = scmp.ne.s32.totalorder %s143, %s144
      %p156 = scmp.eq.s32.totalorder %s24, 1
      %p157 = por %p155, %p156
      %p159 = scmp.ne.s32.totalorder %s144, %s158
      %p160 = scmp.eq.s32.totalorder %s24, 0
      %p161 = por %p159, %p160
      %s163 = sadd.s32 %s162, 1
      %p166 = scmp.eq.s32.totalorder %s18, 1
      %p167 = scmp.ne.s32.totalorder %s162, %s164
      %p168 = scmp.eq.s32.totalorder %s18, 0
      %p169 = por %p167, %p168
      %p170 = scmp.ne.s32.totalorder %s162, %s164
      %p171 = scmp.eq.s32.totalorder %s23, 1
      %p172 = por %p170, %p171
      %p173 = scmp.ne.s32.totalorder %s164, %s165
      %p174 = scmp.eq.s32.totalorder %s23, 0
      %p175 = por %p173, %p174
      %p176 = scmp.ne.s32.totalorder %s164, %s165
      %p177 = scmp.eq.s32.totalorder %s24, 1
      %p178 = por %p176, %p177
      %p180 = scmp.ne.s32.totalorder %s165, %s179
      %p181 = scmp.eq.s32.totalorder %s24, 0
      %p182 = por %p180, %p181
      %s184 = sadd.s32 %s183, 1
      %p187 = scmp.eq.s32.totalorder %s18, 1
      %p188 = scmp.ne.s32.totalorder %s183, %s185
      %p189 = scmp.eq.s32.totalorder %s18, 0
      %p190 = por %p188, %p189
      %p191 = scmp.ne.s32.totalorder %s183, %s185
      %p192 = scmp.eq.s32.totalorder %s23, 1
      %p193 = por %p191, %p192
      %p194 = scmp.ne.s32.totalorder %s185, %s186
      %p195 = scmp.eq.s32.totalorder %s23, 0
      %p196 = por %p194, %p195
      %p197 = scmp.ne.s32.totalorder %s185, %s186
      %p198 = scmp.eq.s32.totalorder %s24, 1
      %p199 = por %p197, %p198
      %p201 = scmp.ne.s32.totalorder %s186, %s200
      %p202 = scmp.eq.s32.totalorder %s24, 0
      %p203 = por %p201, %p202
      %s204 = ssub.s32 %s18, %s25
      %p205 = scmp.eq.s32.totalorder %s204, 0
      %s207 = sadd.s32 %s206, 1
      %s208 = scalar_select %p205, %s206, %s207
      %p211 = pneg %p205
      %p212 = scmp.eq.s32.totalorder %s18, 1
      %p213 = por %p211, %p212
      %p214 = scmp.ne.s32.totalorder %s206, %s209
      %p215 = scmp.eq.s32.totalorder %s18, 0
      %p216 = por %p214, %p215
      %p217 = scmp.ne.s32.totalorder %s206, %s209
      %p218 = scmp.eq.s32.totalorder %s23, 1
      %p219 = por %p217, %p218
      %p220 = scmp.ne.s32.totalorder %s209, %s210
      %p221 = scmp.eq.s32.totalorder %s23, 0
      %p222 = por %p220, %p221
      %p223 = scmp.ne.s32.totalorder %s209, %s210
      %p224 = scmp.eq.s32.totalorder %s24, 1
      %p225 = por %p223, %p224
      %p227 = scmp.ne.s32.totalorder %s210, %s226
      %p228 = scmp.eq.s32.totalorder %s24, 0
      %p229 = por %p227, %p228
      %p230 = scmp.le.s32.totalorder 1, %s18
      %p231 = scmp.lt.s32.totalorder %s18, 3
      %p232 = pnand %p230, %p231
      %p233 = pneg %p232
      // Predicated region
      $region9: #{tpu_custom_call.1} parent=5 // pred_check
        _
      $region10: #{tpu_custom_call.1} parent=5 // pred_check_branch
        %235 = sbr.rel (%p232) target = $region12
      $region11: #{tpu_custom_call.1} parent=5 // pred_region
        %s236 = ssub.s32 %s18, 1
        // Predicated region
        $region13: #{tpu_custom_call.1} parent=11 // pred_check
          %p237 = pneg %p91
        $region14: #{tpu_custom_call.1} parent=11 // pred_check_branch
          %239 = sbr.rel (%p237) target = $region16
        $region15: #{tpu_custom_call.1} parent=11 // pred_region
          _
        $region16: #{tpu_custom_call.1} parent=11 // pred_fallthru
          _
        // Predicated region
        $region17: #{tpu_custom_call.1} parent=11 // pred_check
          %p240 = pneg %p112
        $region18: #{tpu_custom_call.1} parent=11 // pred_check_branch
          %242 = sbr.rel (%p240) target = $region20
        $region19: #{tpu_custom_call.1} parent=11 // pred_region
          _
        $region20: #{tpu_custom_call.1} parent=11 // pred_fallthru
          _
        // Predicated region
        $region21: #{tpu_custom_call.1} parent=11 // pred_check
          %p243 = pneg %p133
        $region22: #{tpu_custom_call.1} parent=11 // pred_check_branch
          %245 = sbr.rel (%p243) target = $region24
        $region23: #{tpu_custom_call.1} parent=11 // pred_region
          _
        $region24: #{tpu_custom_call.1} parent=11 // pred_fallthru
          _
        // Predicated region
        $region25: #{tpu_custom_call.1} parent=11 // pred_check
          %p246 = pneg %p154
        $region26: #{tpu_custom_call.1} parent=11 // pred_check_branch
          %248 = sbr.rel (%p246) target = $region28
        $region27: #{tpu_custom_call.1} parent=11 // pred_region
          _
        $region28: #{tpu_custom_call.1} parent=11 // pred_fallthru
          _
        // Predicated region
        $region29: #{tpu_custom_call.1} parent=11 // pred_check
          %p249 = pneg %p175
        $region30: #{tpu_custom_call.1} parent=11 // pred_check_branch
          %251 = sbr.rel (%p249) target = $region32
        $region31: #{tpu_custom_call.1} parent=11 // pred_region
          _
        $region32: #{tpu_custom_call.1} parent=11 // pred_fallthru
          _
        // Predicated region
        $region33: #{tpu_custom_call.1} parent=11 // pred_check
          %p252 = pneg %p196
        $region34: #{tpu_custom_call.1} parent=11 // pred_check_branch
          %254 = sbr.rel (%p252) target = $region36
        $region35: #{tpu_custom_call.1} parent=11 // pred_region
          %s256 = ssub.s32 128, 128
          %257 = vsyncadd [#allocation3], %s256
          %s259 = sshll.u32 [#allocation2], 4
          %s260 = int_to_ptr.vmem [resolvable:$true] %s259
          %262 = dma.hbm_to_vmem [thread:$0]  %s7, 128, %s260, [#allocation3]
        $region36: #{tpu_custom_call.1} parent=11 // pred_fallthru
          _
      $region12: #{tpu_custom_call.1} parent=5 // pred_fallthru
        _
      %p263 = scmp.lt.s32.totalorder %s18, 2
      // Predicated region
      $region37: #{tpu_custom_call.1} parent=5 // pred_check
        %p264 = pneg %p263
      $region38: #{tpu_custom_call.1} parent=5 // pred_check_branch
        %266 = sbr.rel (%p264) target = $region40
      $region39: #{tpu_custom_call.1} parent=5 // pred_region
        // Predicated region
        $region41: #{tpu_custom_call.1} parent=39 // pred_check
          %p267 = pneg %p38
        $region42: #{tpu_custom_call.1} parent=39 // pred_check_branch
          %269 = sbr.rel (%p267) target = $region44
        $region43: #{tpu_custom_call.1} parent=39 // pred_region
          %p270 = scmp.lt.s32.totalorder %s18, 1
          %s271 = scalar_select %p270, %s18, 1
          %s272 = smul.addr %s271, 2
          %s273 = smul.addr %s272, 4
          %s274 = scalar_lea.vmem %s0, %s273
        $region44: #{tpu_custom_call.1} parent=39 // pred_fallthru
          _
        // Predicated region
        $region45: #{tpu_custom_call.1} parent=39 // pred_check
          %p275 = pneg %p64
        $region46: #{tpu_custom_call.1} parent=39 // pred_check_branch
          %277 = sbr.rel (%p275) target = $region48
        $region47: #{tpu_custom_call.1} parent=39 // pred_region
          %p278 = scmp.lt.s32.totalorder %s18, 1
          %s279 = scalar_select %p278, %s18, 1
          %s280 = smul.addr %s279, 2
          %s281 = smul.addr %s280, 8
          %s282 = scalar_lea.vmem %s1, %s281
        $region48: #{tpu_custom_call.1} parent=39 // pred_fallthru
          _
      $region40: #{tpu_custom_call.1} parent=5 // pred_fallthru
        _
      %p283 = scmp.le.s32.totalorder 1, %s18
      %p284 = scmp.lt.s32.totalorder %s18, 3
      %p285 = pnand %p283, %p284
      %p286 = pneg %p285
      // Predicated region
      $region49: #{tpu_custom_call.1} parent=5 // pred_check
        _
      $region50: #{tpu_custom_call.1} parent=5 // pred_check_branch
        %288 = sbr.rel (%p285) target = $region52
      $region51: #{tpu_custom_call.1} parent=5 // pred_region
        %s289 = ssub.s32 %s18, 1
        // Predicated region
        $region53: #{tpu_custom_call.1} parent=51 // pred_check
          %p290 = pneg %p196
        $region54: #{tpu_custom_call.1} parent=51 // pred_check_branch
          %292 = sbr.rel (%p290) target = $region56
        $region55: #{tpu_custom_call.1} parent=51 // pred_region
          %293 = dma.done [#allocation3], 128
        $region56: #{tpu_custom_call.1} parent=51 // pred_fallthru
          _
        %p294 = scmp.lt.s32.totalorder %s23, 1
        %s295 = scalar_select %p294, %s23, 1
        %s296 = smul.addr %s295, 2
        %s297 = smul.addr %s296, 4
        %s298 = scalar_lea.vmem %s0, %s297
        %p299 = pneg %p44
        %p300 = pneg %p41
        %p301 = scmp.lt.s32.totalorder %s23, 1
        %s302 = scalar_select %p301, %s23, 1
        %s303 = smul.addr %s302, 2
        %s304 = smul.addr %s303, 8
        %s305 = scalar_lea.vmem %s1, %s304
        %p306 = pneg %p70
        %p307 = pneg %p67
        %p308 = pneg %p91
        %p309 = pneg %p88
        %p310 = pneg %p112
        %p311 = pneg %p109
        %p312 = pneg %p133
        %p313 = pneg %p130
        %p314 = pneg %p154
        %p315 = pneg %p151
        %p316 = pneg %p175
        %p317 = pneg %p172
        %p318 = pneg %p196
        %p319 = pneg %p193
        %p320 = pneg %p222
        %p321 = pneg %p219
        %s322 = sand.u32 %s209, 1
        %s323 = scalar_lea.sflag [#allocation4], %s322
        %s324 = sand.u32 %s209, 1
        %s325 = smul.addr %s324, 16
        %s326 = scalar_lea.vmem [#allocation5], %s325
        %p327 = scmp.lt.s32.totalorder %s23, 1
        %s328 = scalar_select %p327, %s23, 1
        %s329 = smul.addr %s328, 2
        %s330 = smul.addr %s329, 4
        %s331 = scalar_lea.vmem %s0, %s330
        %p332 = scmp.lt.s32.totalorder %s23, 1
        %s333 = scalar_select %p332, %s23, 1
        %s334 = smul.addr %s333, 2
        %s335 = smul.addr %s334, 8
        %s336 = scalar_lea.vmem %s1, %s335
        %v338 = vld [vmem:[%s331] sm:$0xf]
        %v339 = vld [vmem:[%s331 + $0x4] sm:$0xf]
        %v340 = vld [vmem:[%s5] sm:$0xff]
        %v341 = vld [vmem:[%s5 + $0x8] sm:$0xff]
        %v342 = vld [vmem:[%s336] sm:$0xff]
        %v343 = vld [vmem:[%s336 + $0x8] sm:$0xff]
        %v344 = vld [vmem:[%s6] sm:$0xff]
        %v345 = vld [vmem:[%s6 + $0x8] sm:$0xff]
        %v346 = vld [vmem:[#allocation2] sm:$0xff]
        %v347 = vunpack.c.l.bf16 %v338
        %v348 = vunpack.c.l.bf16 %v339
        %v349 = vld [vmem:[%s2] sm:$0xf]
        %v350 = vld [vmem:[%s2 + $0x4] sm:$0xf]
        %351 = vrot.lane.b32.xlu0 %v347, 1
        %v352 = vpop.permute.xlu0 %351
        %353 = vrot.lane.b32.xlu0 %v348, 1
        %v354 = vpop.permute.xlu0 %353
        %v355 = vlaneseq
        %v356 = vshrl.u32 %v355, 7
        %v357 = vsub.s32 1, %v356
        %v358 = vrot.slane %v346, %v357
        %v359 = vmul.f32 %v352, %v358
        %v360 = vmul.f32 %v354, %v358
        %v361 = vpack.c.bf16 %v360, %v359
        %362 = vrot.lane.b32.xlu0 %v347, 127
        %v363 = vpop.permute.xlu0 %362
        %364 = vrot.lane.b32.xlu0 %v348, 127
        %v365 = vpop.permute.xlu0 %364
        %v366 = vlaneseq
        %v367 = vshrl.u32 %v366, 7
        %v368 = vsub.s32 2, %v367
        %v369 = vrot.slane %v346, %v368
        %v370 = vmul.f32 %v363, %v369
        %v371 = vmul.f32 %v365, %v369
        %v372 = vpack.c.bf16 %v371, %v370
        %v375 = vunpack.c.l.b16 %v338
        %v376 = vunpack.c.l.b16 %v339
        %v377 = vpack.c.b16 %v376, %v375
        %380 = vset.pattern.permute.xlu0 0
        %381 = vperm.xlu0 %380, %v340
        %v382 = vpop.permute.xlu0 %381
        %385 = vset.pattern.permute.xlu0 0
        %386 = vperm.xlu0 %385, %v341
        %v387 = vpop.permute.xlu0 %386
        %v391 = vunpack.c.l.b16 %v349
        %v392 = vunpack.c.l.b16 %v350
        %v393 = vpack.c.b16 %v392, %v391
        %vm394 = vcmask 392192
        %v396 = vsel %vm394, %v393, 0
        %398 = vmatprep.subr.bf16.mxu0 0
        %399 = vmatpush1.bf16.msra.mxu0 0
        %400 = vmatprep.subr.bf16.mxu0 0
        %401 = vmatpush1.bf16.msra.mxu0 0
        %402 = vmatprep.subr.bf16.mxu0 0
        %403 = vmatpush1.bf16.msra.mxu0 0
        %404 = vmatprep.subr.bf16.mxu0 0
        %405 = vmatpush1.bf16.msra.mxu0 0
        %406 = vmatprep.subr.bf16.mxu0 0
        %407 = vmatpush1.bf16.msra.mxu0 0
        %408 = vmatprep.subr.bf16.mxu0 0
        %409 = vmatpush1.bf16.msra.mxu0 %v372
        %410 = vmatprep.subr.bf16.mxu0 0
        %411 = vmatpush1.bf16.msra.mxu0 %v377
        %412 = vmatprep.subr.bf16.mxu0 0
        %413 = vmatpush1.bf16.msra.mxu0 %v361
        %414 = vmatprep.subr.bf16.mxu0 0
        %415 = vmatpush2.bf16.msra.mxu0 0
        %416 = vmatprep.subr.bf16.mxu0 0
        %417 = vmatpush2.bf16.msra.mxu0 0
        %418 = vmatprep.subr.bf16.mxu0 0
        %419 = vmatpush2.bf16.msra.mxu0 0
        %420 = vmatprep.subr.bf16.mxu0 0
        %421 = vmatpush2.bf16.msra.mxu0 0
        %422 = vmatprep.subr.bf16.mxu0 0
        %423 = vmatpush2.bf16.msra.mxu0 0
        %424 = vmatprep.subr.bf16.mxu0 0
        %425 = vmatpush2.bf16.msra.mxu0 0
        %426 = vmatprep.subr.bf16.mxu0 0
        %427 = vmatpush2.bf16.msra.mxu0 0
        %428 = vmatprep.subr.bf16.mxu0 0
        %429 = vmatpush2.bf16.msra.mxu0 0
        %430 = vmatprep.mubr.bf16.mxu0 0
        %431 = vmatmul.mubr.bf16.gmra.mxu0 %v396
        %v432 = vpop.f32.mrf.mxu0
        %v433 = vadd.f32 %v382, %v432
        %v434 = vpop.f32.mrf.mxu0
        %v435 = vpop.f32.mrf.mxu0
        %v436 = vadd.f32 %v387, %v435
        %v437 = vpop.f32.mrf.mxu0
        %438 = vdwg.mxu0
        %v439 = vlaneseq
        %v440 = vshrl.u32 %v439, 7
        %v441 = vsub.s32 0, %v440
        %v442 = vrot.slane %v346, %v441
        %v443 = vmul.f32 %v433, %v442
        %v444 = vmul.f32 %v436, %v442
        %445 = vadd.xlane.f32.xlu0 %v443
        %v446 = vpop.xlane.xlu0 %445
        %447 = vadd.xlane.f32.xlu0 %v444
        %v448 = vpop.xlane.xlu0 %447
        %vm449 = vcmask 130048
        %v451 = vsel %vm449, %v344, 0
        %v454 = vsel %vm449, %v345, 0
        %456 = vmatprep.subr.mxu0 0.0
        %457 = vmatpush1.msra.mxu0 0.0
        %458 = vmatprep.subr.mxu0 0.0
        %459 = vmatpush1.msra.mxu0 0.0
        %460 = vmatprep.subr.mxu0 0.0
        %461 = vmatpush1.msra.mxu0 0.0
        %462 = vmatprep.subr.mxu0 0.0
        %463 = vmatpush1.msra.mxu0 0.0
        %464 = vmatprep.subr.mxu0 0.0
        %465 = vmatpush1.msra.mxu0 0.0
        %466 = vmatprep.subr.mxu0 0.0
        %467 = vmatpush1.msra.mxu0 0.0
        %468 = vmatprep.subr.mxu0 0.0
        %469 = vmatpush1.msra.mxu0 0.0
        %470 = vmatprep.subr.mxu0 0.0
        %471 = vmatpush1.msra.mxu0 0.0
        %472 = vmatprep.subr.mxu0 0.0
        %473 = vmatpush1.msra.mxu0 0.0
        %474 = vmatprep.subr.mxu0 0.0
        %475 = vmatpush1.msra.mxu0 0.0
        %476 = vmatprep.subr.mxu0 0.0
        %477 = vmatpush1.msra.mxu0 0.0
        %478 = vmatprep.subr.mxu0 0.0
        %479 = vmatpush1.msra.mxu0 0.0
        %480 = vmatprep.subr.mxu0 0.0
        %481 = vmatpush1.msra.mxu0 0.0
        %482 = vmatprep.subr.mxu0 0.0
        %483 = vmatpush1.msra.mxu0 0.0
        %484 = vmatprep.subr.mxu0 0.0
        %485 = vmatpush1.msra.mxu0 %v448
        %486 = vmatprep.subr.mxu0 0.0
        %487 = vmatpush1.msra.mxu0 %v446
        %488 = vmatprep.subr.mxu0 0.0
        %489 = vmatpush2.msra.mxu0 0.0
        %490 = vmatprep.subr.mxu0 0.0
        %491 = vmatpush2.msra.mxu0 0.0
        %492 = vmatprep.subr.mxu0 0.0
        %493 = vmatpush2.msra.mxu0 0.0
        %494 = vmatprep.subr.mxu0 0.0
        %495 = vmatpush2.msra.mxu0 0.0
        %496 = vmatprep.subr.mxu0 0.0
        %497 = vmatpush2.msra.mxu0 0.0
        %498 = vmatprep.subr.mxu0 0.0
        %499 = vmatpush2.msra.mxu0 0.0
        %500 = vmatprep.subr.mxu0 0.0
        %501 = vmatpush2.msra.mxu0 0.0
        %502 = vmatprep.subr.mxu0 0.0
        %503 = vmatpush2.msra.mxu0 0.0
        %504 = vmatprep.subr.mxu0 0.0
        %505 = vmatpush2.msra.mxu0 0.0
        %506 = vmatprep.subr.mxu0 0.0
        %507 = vmatpush2.msra.mxu0 0.0
        %508 = vmatprep.subr.mxu0 0.0
        %509 = vmatpush2.msra.mxu0 0.0
        %510 = vmatprep.subr.mxu0 0.0
        %511 = vmatpush2.msra.mxu0 0.0
        %512 = vmatprep.subr.mxu0 0.0
        %513 = vmatpush2.msra.mxu0 0.0
        %514 = vmatprep.subr.mxu0 0.0
        %515 = vmatpush2.msra.mxu0 0.0
        %516 = vmatprep.subr.mxu0 0.0
        %517 = vmatpush2.msra.mxu0 0.0
        %518 = vmatprep.subr.mxu0 0.0
        %519 = vmatpush2.msra.mxu0 0.0
        %520 = vmatprep.mubr.f32.mxu0 0.0
        %521 = vmatmul.mubr.f32.gmra.mxu0 %v451
        %v522 = vpop.f32.mrf.mxu0
        %v523 = vadd.f32 0.0, %v522
        %v524 = vpop.f32.mrf.mxu0
        %525 = vmatprep.mubr.f32.mxu0 0.0
        %526 = vmatmul.mubr.f32.gmra.mxu0 %v454
        %v527 = vpop.f32.mrf.mxu0
        %v528 = vadd.f32 0.0, %v527
        %v529 = vpop.f32.mrf.mxu0
        %530 = vdwg.mxu0
        %532 = vset.pattern.permute.xlu0 0
        %533 = vperm.xlu0 %532, %v523
        %v534 = vpop.permute.xlu0 %533
        %537 = vset.pattern.permute.xlu0 0
        %538 = vperm.xlu0 %537, %v528
        %v539 = vpop.permute.xlu0 %538
        %v541 = vsub.f32 %v433, %v534
        %v542 = vsub.f32 %v436, %v539
        %v543 = vmul.f32 %v541, %v442
        %v544 = vmul.f32 %v542, %v442
        %v545 = vmul.f32 %v543, %v543
        %v546 = vmul.f32 %v544, %v544
        %547 = vadd.xlane.f32.xlu0 %v545
        %v548 = vpop.xlane.xlu0 %547
        %549 = vadd.xlane.f32.xlu0 %v546
        %v550 = vpop.xlane.xlu0 %549
        %551 = vmatprep.subr.mxu0 0.0
        %552 = vmatpush1.msra.mxu0 0.0
        %553 = vmatprep.subr.mxu0 0.0
        %554 = vmatpush1.msra.mxu0 0.0
        %555 = vmatprep.subr.mxu0 0.0
        %556 = vmatpush1.msra.mxu0 0.0
        %557 = vmatprep.subr.mxu0 0.0
        %558 = vmatpush1.msra.mxu0 0.0
        %559 = vmatprep.subr.mxu0 0.0
        %560 = vmatpush1.msra.mxu0 0.0
        %561 = vmatprep.subr.mxu0 0.0
        %562 = vmatpush1.msra.mxu0 0.0
        %563 = vmatprep.subr.mxu0 0.0
        %564 = vmatpush1.msra.mxu0 0.0
        %565 = vmatprep.subr.mxu0 0.0
        %566 = vmatpush1.msra.mxu0 0.0
        %567 = vmatprep.subr.mxu0 0.0
        %568 = vmatpush1.msra.mxu0 0.0
        %569 = vmatprep.subr.mxu0 0.0
        %570 = vmatpush1.msra.mxu0 0.0
        %571 = vmatprep.subr.mxu0 0.0
        %572 = vmatpush1.msra.mxu0 0.0
        %573 = vmatprep.subr.mxu0 0.0
        %574 = vmatpush1.msra.mxu0 0.0
        %575 = vmatprep.subr.mxu0 0.0
        %576 = vmatpush1.msra.mxu0 0.0
        %577 = vmatprep.subr.mxu0 0.0
        %578 = vmatpush1.msra.mxu0 0.0
        %579 = vmatprep.subr.mxu0 0.0
        %580 = vmatpush1.msra.mxu0 %v550
        %581 = vmatprep.subr.mxu0 0.0
        %582 = vmatpush1.msra.mxu0 %v548
        %583 = vmatprep.subr.mxu0 0.0
        %584 = vmatpush2.msra.mxu0 0.0
        %585 = vmatprep.subr.mxu0 0.0
        %586 = vmatpush2.msra.mxu0 0.0
        %587 = vmatprep.subr.mxu0 0.0
        %588 = vmatpush2.msra.mxu0 0.0
        %589 = vmatprep.subr.mxu0 0.0
        %590 = vmatpush2.msra.mxu0 0.0
        %591 = vmatprep.subr.mxu0 0.0
        %592 = vmatpush2.msra.mxu0 0.0
        %593 = vmatprep.subr.mxu0 0.0
        %594 = vmatpush2.msra.mxu0 0.0
        %595 = vmatprep.subr.mxu0 0.0
        %596 = vmatpush2.msra.mxu0 0.0
        %597 = vmatprep.subr.mxu0 0.0
        %598 = vmatpush2.msra.mxu0 0.0
        %599 = vmatprep.subr.mxu0 0.0
        %600 = vmatpush2.msra.mxu0 0.0
        %601 = vmatprep.subr.mxu0 0.0
        %602 = vmatpush2.msra.mxu0 0.0
        %603 = vmatprep.subr.mxu0 0.0
        %604 = vmatpush2.msra.mxu0 0.0
        %605 = vmatprep.subr.mxu0 0.0
        %606 = vmatpush2.msra.mxu0 0.0
        %607 = vmatprep.subr.mxu0 0.0
        %608 = vmatpush2.msra.mxu0 0.0
        %609 = vmatprep.subr.mxu0 0.0
        %610 = vmatpush2.msra.mxu0 0.0
        %611 = vmatprep.subr.mxu0 0.0
        %612 = vmatpush2.msra.mxu0 0.0
        %613 = vmatprep.subr.mxu0 0.0
        %614 = vmatpush2.msra.mxu0 0.0
        %615 = vmatprep.mubr.f32.mxu0 0.0
        %616 = vmatmul.mubr.f32.gmra.mxu0 %v451
        %v617 = vpop.f32.mrf.mxu0
        %v618 = vadd.f32 1e-05, %v617
        %v619 = vpop.f32.mrf.mxu0
        %620 = vmatprep.mubr.f32.mxu0 0.0
        %621 = vmatmul.mubr.f32.gmra.mxu0 %v454
        %v622 = vpop.f32.mrf.mxu0
        %v623 = vadd.f32 1e-05, %v622
        %v624 = vpop.f32.mrf.mxu0
        %625 = vdwg.mxu0
        %v626 = vrsqrt.pop %v618
        %v627 = vrsqrt.pop %v623
        %629 = vset.pattern.permute.xlu0 0
        %630 = vperm.xlu0 %629, %v626
        %v631 = vpop.permute.xlu0 %630
        %634 = vset.pattern.permute.xlu0 0
        %635 = vperm.xlu0 %634, %v627
        %v636 = vpop.permute.xlu0 %635
        %v638 = vmul.f32 %v541, %v631
        %v639 = vmul.f32 %v542, %v636
        %640 = vset.pattern.permute.xlu0 1
        %641 = vperm.xlu0 %640, %v340
        %v642 = vpop.permute.xlu0 %641
        %644 = vset.pattern.permute.xlu0 1
        %645 = vperm.xlu0 %644, %v341
        %v646 = vpop.permute.xlu0 %645
        %v648 = vmul.f32 %v638, %v642
        %v649 = vmul.f32 %v639, %v646
        %650 = vset.pattern.permute.xlu0 2
        %651 = vperm.xlu0 %650, %v340
        %v652 = vpop.permute.xlu0 %651
        %654 = vset.pattern.permute.xlu0 2
        %655 = vperm.xlu0 %654, %v341
        %v656 = vpop.permute.xlu0 %655
        %v658 = vadd.f32 %v648, %v652
        %v659 = vadd.f32 %v649, %v656
        %v660 = vadd.f32 %v342, 1.0
        %v661 = vadd.f32 %v343, 1.0
        %663 = vset.pattern.permute.xlu0 0
        %664 = vperm.xlu0 %663, %v660
        %v665 = vpop.permute.xlu0 %664
        %668 = vset.pattern.permute.xlu0 0
        %669 = vperm.xlu0 %668, %v661
        %v670 = vpop.permute.xlu0 %669
        %v672 = vmul.f32 %v658, %v665
        %v673 = vmul.f32 %v659, %v670
        %675 = vset.pattern.permute.xlu0 1
        %676 = vperm.xlu0 %675, %v342
        %v677 = vpop.permute.xlu0 %676
        %680 = vset.pattern.permute.xlu0 1
        %681 = vperm.xlu0 %680, %v343
        %v682 = vpop.permute.xlu0 %681
        %v684 = vadd.f32 %v672, %v677
        %v685 = vadd.f32 %v673, %v682
        %v686 = vxor.u32 %v684, 2147483648
        %v687 = vxor.u32 %v685, 2147483648
        %v688 = vmul.f32 %v686, 1.442695
        %v689 = vpow.pop %v688
        %v690 = vmul.f32 %v687, 1.442695
        %v691 = vpow.pop %v690
        %v692 = vadd.f32 %v689, 1.0
        %v693 = vadd.f32 %v691, 1.0
        %v694 = vrcp.pop %v692
        %v695 = vmul.f32 1.0, %v694
        %v696 = vrcp.pop %v693
        %v697 = vmul.f32 1.0, %v696
        %v698 = vmul.f32 %v684, %v695
        %v699 = vmul.f32 %v685, %v697
        %v700 = vmul.f32 %v698, %v442
        %v701 = vmul.f32 %v699, %v442
        %v702 = vpack.c.bf16 %v701, %v700
        %v703 = vld [vmem:[%s3] sm:$0xf]
        %v704 = vld [vmem:[%s3 + $0x4] sm:$0xf]
        %705 = vrot.lane.b32.xlu0 %v700, 1
        %v706 = vpop.permute.xlu0 %705
        %707 = vrot.lane.b32.xlu0 %v701, 1
        %v708 = vpop.permute.xlu0 %707
        %v709 = vmul.f32 %v706, %v358
        %v710 = vmul.f32 %v708, %v358
        %v711 = vpack.c.bf16 %v710, %v709
        %712 = vrot.lane.b32.xlu0 %v700, 127
        %v713 = vpop.permute.xlu0 %712
        %714 = vrot.lane.b32.xlu0 %v701, 127
        %v715 = vpop.permute.xlu0 %714
        %v716 = vmul.f32 %v713, %v369
        %v717 = vmul.f32 %v715, %v369
        %v718 = vpack.c.bf16 %v717, %v716
        %719 = vset.pattern.permute.xlu0 3
        %720 = vperm.xlu0 %719, %v340
        %v721 = vpop.permute.xlu0 %720
        %723 = vset.pattern.permute.xlu0 3
        %724 = vperm.xlu0 %723, %v341
        %v725 = vpop.permute.xlu0 %724
        %v729 = vunpack.c.l.b16 %v703
        %v730 = vunpack.c.l.b16 %v704
        %v731 = vpack.c.b16 %v730, %v729
        %v733 = vsel %vm394, %v731, 0
        %735 = vmatprep.subr.bf16.mxu0 0
        %736 = vmatpush1.bf16.msra.mxu0 0
        %737 = vmatprep.subr.bf16.mxu0 0
        %738 = vmatpush1.bf16.msra.mxu0 0
        %739 = vmatprep.subr.bf16.mxu0 0
        %740 = vmatpush1.bf16.msra.mxu0 0
        %741 = vmatprep.subr.bf16.mxu0 0
        %742 = vmatpush1.bf16.msra.mxu0 0
        %743 = vmatprep.subr.bf16.mxu0 0
        %744 = vmatpush1.bf16.msra.mxu0 0
        %745 = vmatprep.subr.bf16.mxu0 0
        %746 = vmatpush1.bf16.msra.mxu0 %v718
        %747 = vmatprep.subr.bf16.mxu0 0
        %748 = vmatpush1.bf16.msra.mxu0 %v702
        %749 = vmatprep.subr.bf16.mxu0 0
        %750 = vmatpush1.bf16.msra.mxu0 %v711
        %751 = vmatprep.subr.bf16.mxu0 0
        %752 = vmatpush2.bf16.msra.mxu0 0
        %753 = vmatprep.subr.bf16.mxu0 0
        %754 = vmatpush2.bf16.msra.mxu0 0
        %755 = vmatprep.subr.bf16.mxu0 0
        %756 = vmatpush2.bf16.msra.mxu0 0
        %757 = vmatprep.subr.bf16.mxu0 0
        %758 = vmatpush2.bf16.msra.mxu0 0
        %759 = vmatprep.subr.bf16.mxu0 0
        %760 = vmatpush2.bf16.msra.mxu0 0
        %761 = vmatprep.subr.bf16.mxu0 0
        %762 = vmatpush2.bf16.msra.mxu0 0
        %763 = vmatprep.subr.bf16.mxu0 0
        %764 = vmatpush2.bf16.msra.mxu0 0
        %765 = vmatprep.subr.bf16.mxu0 0
        %766 = vmatpush2.bf16.msra.mxu0 0
        %767 = vmatprep.mubr.bf16.mxu0 0
        %768 = vmatmul.mubr.bf16.gmra.mxu0 %v733
        %v769 = vpop.f32.mrf.mxu0
        %v770 = vadd.f32 %v721, %v769
        %v771 = vpop.f32.mrf.mxu0
        %v772 = vpop.f32.mrf.mxu0
        %v773 = vadd.f32 %v725, %v772
        %v774 = vpop.f32.mrf.mxu0
        %775 = vdwg.mxu0
        %v776 = vmul.f32 %v770, %v442
        %v777 = vmul.f32 %v773, %v442
        %778 = vadd.xlane.f32.xlu0 %v776
        %v779 = vpop.xlane.xlu0 %778
        %780 = vadd.xlane.f32.xlu0 %v777
        %v781 = vpop.xlane.xlu0 %780
        %782 = vmatprep.subr.mxu0 0.0
        %783 = vmatpush1.msra.mxu0 0.0
        %784 = vmatprep.subr.mxu0 0.0
        %785 = vmatpush1.msra.mxu0 0.0
        %786 = vmatprep.subr.mxu0 0.0
        %787 = vmatpush1.msra.mxu0 0.0
        %788 = vmatprep.subr.mxu0 0.0
        %789 = vmatpush1.msra.mxu0 0.0
        %790 = vmatprep.subr.mxu0 0.0
        %791 = vmatpush1.msra.mxu0 0.0
        %792 = vmatprep.subr.mxu0 0.0
        %793 = vmatpush1.msra.mxu0 0.0
        %794 = vmatprep.subr.mxu0 0.0
        %795 = vmatpush1.msra.mxu0 0.0
        %796 = vmatprep.subr.mxu0 0.0
        %797 = vmatpush1.msra.mxu0 0.0
        %798 = vmatprep.subr.mxu0 0.0
        %799 = vmatpush1.msra.mxu0 0.0
        %800 = vmatprep.subr.mxu0 0.0
        %801 = vmatpush1.msra.mxu0 0.0
        %802 = vmatprep.subr.mxu0 0.0
        %803 = vmatpush1.msra.mxu0 0.0
        %804 = vmatprep.subr.mxu0 0.0
        %805 = vmatpush1.msra.mxu0 0.0
        %806 = vmatprep.subr.mxu0 0.0
        %807 = vmatpush1.msra.mxu0 0.0
        %808 = vmatprep.subr.mxu0 0.0
        %809 = vmatpush1.msra.mxu0 0.0
        %810 = vmatprep.subr.mxu0 0.0
        %811 = vmatpush1.msra.mxu0 %v781
        %812 = vmatprep.subr.mxu0 0.0
        %813 = vmatpush1.msra.mxu0 %v779
        %814 = vmatprep.subr.mxu0 0.0
        %815 = vmatpush2.msra.mxu0 0.0
        %816 = vmatprep.subr.mxu0 0.0
        %817 = vmatpush2.msra.mxu0 0.0
        %818 = vmatprep.subr.mxu0 0.0
        %819 = vmatpush2.msra.mxu0 0.0
        %820 = vmatprep.subr.mxu0 0.0
        %821 = vmatpush2.msra.mxu0 0.0
        %822 = vmatprep.subr.mxu0 0.0
        %823 = vmatpush2.msra.mxu0 0.0
        %824 = vmatprep.subr.mxu0 0.0
        %825 = vmatpush2.msra.mxu0 0.0
        %826 = vmatprep.subr.mxu0 0.0
        %827 = vmatpush2.msra.mxu0 0.0
        %828 = vmatprep.subr.mxu0 0.0
        %829 = vmatpush2.msra.mxu0 0.0
        %830 = vmatprep.subr.mxu0 0.0
        %831 = vmatpush2.msra.mxu0 0.0
        %832 = vmatprep.subr.mxu0 0.0
        %833 = vmatpush2.msra.mxu0 0.0
        %834 = vmatprep.subr.mxu0 0.0
        %835 = vmatpush2.msra.mxu0 0.0
        %836 = vmatprep.subr.mxu0 0.0
        %837 = vmatpush2.msra.mxu0 0.0
        %838 = vmatprep.subr.mxu0 0.0
        %839 = vmatpush2.msra.mxu0 0.0
        %840 = vmatprep.subr.mxu0 0.0
        %841 = vmatpush2.msra.mxu0 0.0
        %842 = vmatprep.subr.mxu0 0.0
        %843 = vmatpush2.msra.mxu0 0.0
        %844 = vmatprep.subr.mxu0 0.0
        %845 = vmatpush2.msra.mxu0 0.0
        %846 = vmatprep.mubr.f32.mxu0 0.0
        %847 = vmatmul.mubr.f32.gmra.mxu0 %v451
        %v848 = vpop.f32.mrf.mxu0
        %v849 = vadd.f32 0.0, %v848
        %v850 = vpop.f32.mrf.mxu0
        %851 = vmatprep.mubr.f32.mxu0 0.0
        %852 = vmatmul.mubr.f32.gmra.mxu0 %v454
        %v853 = vpop.f32.mrf.mxu0
        %v854 = vadd.f32 0.0, %v853
        %v855 = vpop.f32.mrf.mxu0
        %856 = vdwg.mxu0
        %858 = vset.pattern.permute.xlu0 0
        %859 = vperm.xlu0 %858, %v849
        %v860 = vpop.permute.xlu0 %859
        %863 = vset.pattern.permute.xlu0 0
        %864 = vperm.xlu0 %863, %v854
        %v865 = vpop.permute.xlu0 %864
        %v867 = vsub.f32 %v770, %v860
        %v868 = vsub.f32 %v773, %v865
        %v869 = vmul.f32 %v867, %v442
        %v870 = vmul.f32 %v868, %v442
        %v871 = vmul.f32 %v869, %v869
        %v872 = vmul.f32 %v870, %v870
        %873 = vadd.xlane.f32.xlu0 %v871
        %v874 = vpop.xlane.xlu0 %873
        %875 = vadd.xlane.f32.xlu0 %v872
        %v876 = vpop.xlane.xlu0 %875
        %877 = vmatprep.subr.mxu0 0.0
        %878 = vmatpush1.msra.mxu0 0.0
        %879 = vmatprep.subr.mxu0 0.0
        %880 = vmatpush1.msra.mxu0 0.0
        %881 = vmatprep.subr.mxu0 0.0
        %882 = vmatpush1.msra.mxu0 0.0
        %883 = vmatprep.subr.mxu0 0.0
        %884 = vmatpush1.msra.mxu0 0.0
        %885 = vmatprep.subr.mxu0 0.0
        %886 = vmatpush1.msra.mxu0 0.0
        %887 = vmatprep.subr.mxu0 0.0
        %888 = vmatpush1.msra.mxu0 0.0
        %889 = vmatprep.subr.mxu0 0.0
        %890 = vmatpush1.msra.mxu0 0.0
        %891 = vmatprep.subr.mxu0 0.0
        %892 = vmatpush1.msra.mxu0 0.0
        %893 = vmatprep.subr.mxu0 0.0
        %894 = vmatpush1.msra.mxu0 0.0
        %895 = vmatprep.subr.mxu0 0.0
        %896 = vmatpush1.msra.mxu0 0.0
        %897 = vmatprep.subr.mxu0 0.0
        %898 = vmatpush1.msra.mxu0 0.0
        %899 = vmatprep.subr.mxu0 0.0
        %900 = vmatpush1.msra.mxu0 0.0
        %901 = vmatprep.subr.mxu0 0.0
        %902 = vmatpush1.msra.mxu0 0.0
        %903 = vmatprep.subr.mxu0 0.0
        %904 = vmatpush1.msra.mxu0 0.0
        %905 = vmatprep.subr.mxu0 0.0
        %906 = vmatpush1.msra.mxu0 %v876
        %907 = vmatprep.subr.mxu0 0.0
        %908 = vmatpush1.msra.mxu0 %v874
        %909 = vmatprep.subr.mxu0 0.0
        %910 = vmatpush2.msra.mxu0 0.0
        %911 = vmatprep.subr.mxu0 0.0
        %912 = vmatpush2.msra.mxu0 0.0
        %913 = vmatprep.subr.mxu0 0.0
        %914 = vmatpush2.msra.mxu0 0.0
        %915 = vmatprep.subr.mxu0 0.0
        %916 = vmatpush2.msra.mxu0 0.0
        %917 = vmatprep.subr.mxu0 0.0
        %918 = vmatpush2.msra.mxu0 0.0
        %919 = vmatprep.subr.mxu0 0.0
        %920 = vmatpush2.msra.mxu0 0.0
        %921 = vmatprep.subr.mxu0 0.0
        %922 = vmatpush2.msra.mxu0 0.0
        %923 = vmatprep.subr.mxu0 0.0
        %924 = vmatpush2.msra.mxu0 0.0
        %925 = vmatprep.subr.mxu0 0.0
        %926 = vmatpush2.msra.mxu0 0.0
        %927 = vmatprep.subr.mxu0 0.0
        %928 = vmatpush2.msra.mxu0 0.0
        %929 = vmatprep.subr.mxu0 0.0
        %930 = vmatpush2.msra.mxu0 0.0
        %931 = vmatprep.subr.mxu0 0.0
        %932 = vmatpush2.msra.mxu0 0.0
        %933 = vmatprep.subr.mxu0 0.0
        %934 = vmatpush2.msra.mxu0 0.0
        %935 = vmatprep.subr.mxu0 0.0
        %936 = vmatpush2.msra.mxu0 0.0
        %937 = vmatprep.subr.mxu0 0.0
        %938 = vmatpush2.msra.mxu0 0.0
        %939 = vmatprep.subr.mxu0 0.0
        %940 = vmatpush2.msra.mxu0 0.0
        %941 = vmatprep.mubr.f32.mxu0 0.0
        %942 = vmatmul.mubr.f32.gmra.mxu0 %v451
        %v943 = vpop.f32.mrf.mxu0
        %v944 = vadd.f32 1e-05, %v943
        %v945 = vpop.f32.mrf.mxu0
        %946 = vmatprep.mubr.f32.mxu0 0.0
        %947 = vmatmul.mubr.f32.gmra.mxu0 %v454
        %v948 = vpop.f32.mrf.mxu0
        %v949 = vadd.f32 1e-05, %v948
        %v950 = vpop.f32.mrf.mxu0
        %951 = vdwg.mxu0
        %v952 = vrsqrt.pop %v944
        %v953 = vrsqrt.pop %v949
        %955 = vset.pattern.permute.xlu0 0
        %956 = vperm.xlu0 %955, %v952
        %v957 = vpop.permute.xlu0 %956
        %960 = vset.pattern.permute.xlu0 0
        %961 = vperm.xlu0 %960, %v953
        %v962 = vpop.permute.xlu0 %961
        %v964 = vmul.f32 %v867, %v957
        %v965 = vmul.f32 %v868, %v962
        %966 = vset.pattern.permute.xlu0 4
        %967 = vperm.xlu0 %966, %v340
        %v968 = vpop.permute.xlu0 %967
        %970 = vset.pattern.permute.xlu0 4
        %971 = vperm.xlu0 %970, %v341
        %v972 = vpop.permute.xlu0 %971
        %v974 = vmul.f32 %v964, %v968
        %v975 = vmul.f32 %v965, %v972
        %976 = vset.pattern.permute.xlu0 5
        %977 = vperm.xlu0 %976, %v340
        %v978 = vpop.permute.xlu0 %977
        %980 = vset.pattern.permute.xlu0 5
        %981 = vperm.xlu0 %980, %v341
        %v982 = vpop.permute.xlu0 %981
        %v984 = vadd.f32 %v974, %v978
        %v985 = vadd.f32 %v975, %v982
        %v986 = vxor.u32 %v984, 2147483648
        %v987 = vxor.u32 %v985, 2147483648
        %v988 = vmul.f32 %v986, 1.442695
        %v989 = vpow.pop %v988
        %v990 = vmul.f32 %v987, 1.442695
        %v991 = vpow.pop %v990
        %v992 = vadd.f32 %v989, 1.0
        %v993 = vadd.f32 %v991, 1.0
        %v994 = vrcp.pop %v992
        %v995 = vmul.f32 1.0, %v994
        %v996 = vrcp.pop %v993
        %v997 = vmul.f32 1.0, %v996
        %v998 = vmul.f32 %v984, %v995
        %v999 = vmul.f32 %v985, %v997
        %v1000 = vld [vmem:[%s4] sm:$0xf]
        %v1001 = vld [vmem:[%s4 + $0x4] sm:$0xf]
        %1002 = vset.pattern.permute.xlu0 6
        %1003 = vperm.xlu0 %1002, %v340
        %v1004 = vpop.permute.xlu0 %1003
        %1006 = vset.pattern.permute.xlu0 6
        %1007 = vperm.xlu0 %1006, %v341
        %v1008 = vpop.permute.xlu0 %1007
        %v1012 = vunpack.c.l.b16 %v1000
        %v1013 = vunpack.c.l.b16 %v1001
        %v1014 = vpack.c.b16 %v1013, %v1012
        %v1016 = vsel %vm449, %v1014, 0
        %1018 = vmatprep.subr.bf16.mxu0 0
        %1019 = vmatpush1.bf16.msra.mxu0 0
        %1020 = vmatprep.subr.bf16.mxu0 0
        %1021 = vmatpush1.bf16.msra.mxu0 0
        %1022 = vmatprep.subr.bf16.mxu0 0
        %1023 = vmatpush1.bf16.msra.mxu0 0
        %1024 = vmatprep.subr.bf16.mxu0 0
        %1025 = vmatpush1.bf16.msra.mxu0 0
        %1026 = vmatprep.subr.bf16.mxu0 0
        %1027 = vmatpush1.bf16.msra.mxu0 0
        %1028 = vmatprep.subr.bf16.mxu0 0
        %1029 = vmatpush1.bf16.msra.mxu0 0
        %1030 = vmatprep.subr.bf16.mxu0 0
        %1031 = vmatpush1.bf16.msra.mxu0 0
        %1032 = vmatprep.subr.bf16.mxu0 0
        %1033 = vmatpush1.bf16.msra.mxu0 %v377
        %1034 = vmatprep.subr.bf16.mxu0 0
        %1035 = vmatpush2.bf16.msra.mxu0 0
        %1036 = vmatprep.subr.bf16.mxu0 0
        %1037 = vmatpush2.bf16.msra.mxu0 0
        %1038 = vmatprep.subr.bf16.mxu0 0
        %1039 = vmatpush2.bf16.msra.mxu0 0
        %1040 = vmatprep.subr.bf16.mxu0 0
        %1041 = vmatpush2.bf16.msra.mxu0 0
        %1042 = vmatprep.subr.bf16.mxu0 0
        %1043 = vmatpush2.bf16.msra.mxu0 0
        %1044 = vmatprep.subr.bf16.mxu0 0
        %1045 = vmatpush2.bf16.msra.mxu0 0
        %1046 = vmatprep.subr.bf16.mxu0 0
        %1047 = vmatpush2.bf16.msra.mxu0 0
        %1048 = vmatprep.subr.bf16.mxu0 0
        %1049 = vmatpush2.bf16.msra.mxu0 0
        %1050 = vmatprep.mubr.bf16.mxu0 0
        %1051 = vmatmul.mubr.bf16.gmra.mxu0 %v1016
        %v1052 = vpop.f32.mrf.mxu0
        %v1053 = vadd.f32 %v1004, %v1052
        %v1054 = vpop.f32.mrf.mxu0
        %v1055 = vpop.f32.mrf.mxu0
        %v1056 = vadd.f32 %v1008, %v1055
        %v1057 = vpop.f32.mrf.mxu0
        %1058 = vdwg.mxu0
        %v1059 = vadd.f32 %v998, %v1053
        %v1060 = vadd.f32 %v999, %v1056
        %1061 = vst [vmem:[%s326] sm:$0xff] %v1059
        %1062 = vst [vmem:[%s326 + $0x8] sm:$0xff] %v1060
        %s1063 = sand.u32 %s209, 1
        %s1064 = scalar_lea.sflag [#allocation4], %s1063
        %s1065 = sand.u32 %s209, 1
        %s1066 = smul.addr %s1065, 16
        %s1067 = scalar_lea.vmem [#allocation5], %s1066
        // Predicated region
        $region57: #{tpu_custom_call.1} parent=51 // pred_check
          %p1068 = pneg %p219
        $region58: #{tpu_custom_call.1} parent=51 // pred_check_branch
          %1070 = sbr.rel (%p1068) target = $region60
        $region59: #{tpu_custom_call.1} parent=51 // pred_region
          %s1072 = ssub.s32 256, 256
          %1073 = vsyncadd %s1064, %s1072
          %s1074 = smul.addr %s23, 2
          %s1075 = smul.addr %s1074, 128
          %s1076 = scalar_lea.hbm %s8, %s1075
          %s1077 = sshll.u32 %s1067, 4
          %s1078 = int_to_ptr.vmem [resolvable:$true] %s1077
          %1083 = dma.vmem_to_hbm [thread:$0]  %s1078, 256, %s1076, %s1064, 128, 128, 8
        $region60: #{tpu_custom_call.1} parent=51 // pred_fallthru
          _
      $region52: #{tpu_custom_call.1} parent=5 // pred_fallthru
        _
      %p1084 = scmp.le.s32.totalorder 2, %s18
      // Predicated region
      $region61: #{tpu_custom_call.1} parent=5 // pred_check
        %p1085 = pneg %p1084
      $region62: #{tpu_custom_call.1} parent=5 // pred_check_branch
        %1087 = sbr.rel (%p1085) target = $region64
      $region63: #{tpu_custom_call.1} parent=5 // pred_region
        %s1088 = ssub.s32 %s18, 2
        // Predicated region
        $region65: #{tpu_custom_call.1} parent=63 // pred_check
          %p1089 = pneg %p225
        $region66: #{tpu_custom_call.1} parent=63 // pred_check_branch
          %1091 = sbr.rel (%p1089) target = $region68
        $region67: #{tpu_custom_call.1} parent=63 // pred_region
          %s1092 = sand.u32 %s210, 1
          %s1093 = scalar_lea.sflag [#allocation4], %s1092
          %s1094 = sand.u32 %s210, 1
          %s1095 = smul.addr %s1094, 16
          %s1096 = scalar_lea.vmem [#allocation5], %s1095
          %1097 = dma.done %s1093, 256
        $region68: #{tpu_custom_call.1} parent=63 // pred_fallthru
          _
      $region64: #{tpu_custom_call.1} parent=5 // pred_fallthru
        _
    $region6: #{tpu_custom_call.1} parent=1 // loop_footer
      %s22 = sadd.s32 1, %s18
    $region7: #{tpu_custom_call.1} parent=1 // loop_footer_branch
      %17 = sbr.rel target = $region3
    $region8: #{tpu_custom_call.1} parent=1 // loop_exit
      _
    %1098 = vsyncpa [#allocation3], 1
    %s1099 = scalar_lea.sflag [#allocation3], 1
    %1100 = vsyncpa %s1099, 1
    %1101 = vsyncpa [#allocation4], 1
    %s1102 = scalar_lea.sflag [#allocation4], 1
    %1103 = vsyncpa %s1102, 1

</llo_original>
